<compile_context>
chip_gen: v7x
topology: tpu7x:2x2x1
jax: 0.10.0
libtpu: 0.0.40
codegen_flags: <defaults>
</compile_context>

<pallas_src>
import jax
import jax.numpy as jnp
from jax import lax
from jax.experimental import pallas as pl
from jax.experimental.pallas import tpu as pltpu


# ---------------------------------------------------------------------------
# Parameter packing — done ONCE, outside the per-step path.
# ---------------------------------------------------------------------------
def pack_rnn_params(wo, bo, wh, bh):
    """Pack PyTorch-layout weights into split, hidden-first fused matrices.

    wo : (n_out, n_in + n_hid)  -- i2o.weight (PyTorch layout)
    bo : (n_out,)               -- i2o.bias
    wh : (n_hid, n_in + n_hid)  -- i2h.weight
    bh : (n_hid,)               -- i2h.bias

    Returns (w_x, w_h, b_fused) with fused column order [hidden | output]:
        x @ w_x + h @ w_h + b_fused
            == [ i2h(cat(x, h)) | i2o(cat(x, h)) ]
    Hidden-first columns keep the recurrent carry lane-0 aligned.
    """
    n_hid = wh.shape[0]
    fan_in = wh.shape[1]
    n_in = fan_in - n_hid
    w_fused = jnp.concatenate([wh, wo], axis=0).T          # (fan_in, n_hid+n_out)
    b_fused = jnp.concatenate([bh, bo], axis=0)[None, :]   # (1, n_hid+n_out)
    return w_fused[:n_in], w_fused[n_in:], b_fused


# ---------------------------------------------------------------------------
# Single-step cell kernel (exact semantics of RNN.forward).
# ---------------------------------------------------------------------------
def _rnn_cell_kernel(x_ref, h_ref, wx_ref, wh_ref, b_ref, fused_ref):
    # fused = [h_new | output]; two MXU pushes, no in-VMEM concat copy.
    fused_ref[...] = (
        jnp.dot(x_ref[...], wx_ref[...], preferred_element_type=jnp.float32)
        + jnp.dot(h_ref[...], wh_ref[...], preferred_element_type=jnp.float32)
        + b_ref[...]
    ).astype(fused_ref.dtype)


def rnn_cell(inpt, hidn, w_x, w_h, b_packed, n_output):
    """One RNN step. Returns (output (B, n_out), hidden (B, n_hid))."""
    B = inpt.shape[0]
    n_hid = hidn.shape[1]
    n_fused = n_hid + n_output

    fused = pl.pallas_call(
        _rnn_cell_kernel,
        out_shape=jax.ShapeDtypeStruct((B, n_fused), jnp.float32),
    )(inpt, hidn, w_x, w_h, b_packed)
    return fused[:, n_hid:], fused[:, :n_hid]


# ---------------------------------------------------------------------------
# Multi-step recurrence: T-blocked grid, unrolled inner loop, weights resident.
# ---------------------------------------------------------------------------
def _rnn_scan_kernel(x_ref, h0_ref, wx_ref, wh_ref, b_ref,
                     fused_ref, hT_ref, h_scr):
    tb = pl.program_id(0)

    # Seed the carried hidden state once, at the first time-block.
    @pl.when(tb == 0)
    def _():
        h_scr[...] = h0_ref[...]

    t_blk = x_ref.shape[0]
    n_hid = h_scr.shape[-1]

    # Hoist resident operands out of the unrolled loop.
    w_x = wx_ref[...]
    w_h = wh_ref[...]
    b = b_ref[...]

    def step(i, h):
        # fused = [h_next | o_t]; hidden at lane 0 on both sides of the
        # recurrence, so the carry is a plain slice (no cross-lane shuffle).
        fused = (
            jnp.dot(x_ref[i], w_x, preferred_element_type=jnp.float32)
            + jnp.dot(h, w_h, preferred_element_type=jnp.float32)
            + b
        )
        fused_ref[i] = fused.astype(fused_ref.dtype)
        return fused[:, :n_hid]

    h = lax.fori_loop(0, t_blk, step, h_scr[...], unroll=True)
    h_scr[...] = h  # carry across time-blocks (serial "arbitrary" axis)

    @pl.when(tb == pl.num_programs(0) - 1)
    def _():
        hT_ref[...] = h.astype(hT_ref.dtype)


def _build_rnn_scan_call(T, B, n_in, n_hid, n_out, t_blk, single_buffer_resident):
    n_fused = n_hid + n_out

    def resident(shape):
        idx = lambda t, _n=len(shape): (0,) * _n
        if single_buffer_resident:
            # Constant index_map -> never re-fetched -> one VMEM buffer is enough.
            return pl.BlockSpec(shape, idx, pipeline_mode=pl.Buffered(1))
        return pl.BlockSpec(shape, idx)

    return pl.pallas_call(
        _rnn_scan_kernel,
        grid=(T // t_blk,),
        in_specs=[
            pl.BlockSpec((t_blk, B, n_in), lambda t: (t, 0, 0)),  # x: streamed per block
            resident((B, n_hid)),                                  # h0: resident
            resident((n_in, n_fused)),                             # W_x: resident
            resident((n_hid, n_fused)),                            # W_h: resident
            resident((1, n_fused)),                                # b: resident
        ],
        out_specs=(
            pl.BlockSpec((t_blk, B, n_fused), lambda t: (t, 0, 0)),  # fused, lane-dense
            pl.BlockSpec((B, n_hid), lambda t: (0, 0)),              # final hidden
        ),
        out_shape=(
            jax.ShapeDtypeStruct((T, B, n_fused), jnp.float32),
            jax.ShapeDtypeStruct((B, n_hid), jnp.float32),
        ),
        scratch_shapes=[pltpu.VMEM((B, n_hid), jnp.float32)],
        compiler_params=pltpu.CompilerParams(
            dimension_semantics=("arbitrary",)),  # time is serial, never parallel
    )


def rnn_scan(xs, h0, w_x, w_h, b_packed, n_output, t_blk=4):
    """Run the cell over xs (T, B, n_in) in one T-blocked pallas_call.

    Returns (outputs (T, B, n_out), final hidden (B, n_hid)).
    """
    T, B, n_in = xs.shape
    n_hid = h0.shape[1]
    if T % t_blk != 0:
        raise ValueError(f"T={T} must be divisible by t_blk={t_blk}")

    try:
        call = _build_rnn_scan_call(T, B, n_in, n_hid, n_output, t_blk, True)
        fused, hT = call(xs, h0, w_x, w_h, b_packed)
        jax.block_until_ready((fused, hT))
    except Exception:
        # pl.Buffered(1) not accepted by this build's top-level pipeline ->
        # fall back to default double-buffering (correctness identical).
        call = _build_rnn_scan_call(T, B, n_in, n_hid, n_output, t_blk, False)
        fused, hT = call(xs, h0, w_x, w_h, b_packed)

    return fused[:, :, n_hid:], hT


if __name__ == "__main__":
    # Small deterministic sizes consistent with the module.
    B = 2
    n_input = 16
    n_hidden = 32
    n_output = 8
    T = 8
    T_BLK = 4  # 2 grid steps, 4 unrolled recurrence steps each

    key = jax.random.PRNGKey(0)
    k_x, k_h, k_wo, k_bo, k_wh, k_bh, k_seq = jax.random.split(key, 7)

    fan_in = n_input + n_hidden
    bound = 1.0 / jnp.sqrt(jnp.float32(fan_in))
    wo = jax.random.uniform(k_wo, (n_output, fan_in), jnp.float32, -bound, bound)
    bo = jax.random.uniform(k_bo, (n_output,), jnp.float32, -bound, bound)
    wh = jax.random.uniform(k_wh, (n_hidden, fan_in), jnp.float32, -bound, bound)
    bh = jax.random.uniform(k_bh, (n_hidden,), jnp.float32, -bound, bound)

    inpt = jax.random.normal(k_x, (B, n_input), jnp.float32)
    hidn = jax.random.normal(k_h, (B, n_hidden), jnp.float32)

    # Pack weights ONCE (hoisted out of the per-step path).
    w_x, w_h, b_packed = jax.block_until_ready(pack_rnn_params(wo, bo, wh, bh))

    # --- single step: exact RNN.forward semantics --------------------------
    out, hid = rnn_cell(inpt, hidn, w_x, w_h, b_packed, n_output)
    jax.block_until_ready((out, hid))

    concat = jnp.concatenate([inpt, hidn], axis=1)
    ref_out = concat @ wo.T + bo
    ref_hid = concat @ wh.T + bh
    assert out.shape == (B, n_output) and hid.shape == (B, n_hidden)
    assert jnp.allclose(out, ref_out, atol=1e-4, rtol=1e-4)
    assert jnp.allclose(hid, ref_hid, atol=1e-4, rtol=1e-4)

    # --- multi-step recurrence: T-blocked single launch ---------------------
    xs = jax.random.normal(k_seq, (T, B, n_input), jnp.float32)
    h0 = jnp.zeros((B, n_hidden), jnp.float32)  # RNN.initHidden(), batched
    seq_out, hT = rnn_scan(xs, h0, w_x, w_h, b_packed, n_output, t_blk=T_BLK)
    jax.block_until_ready((seq_out, hT))

    def ref_step(h, x):
        c = jnp.concatenate([x, h], axis=1)
        return c @ wh.T + bh, c @ wo.T + bo

    ref_hT, ref_seq = lax.scan(ref_step, h0, xs)
    assert seq_out.shape == (T, B, n_output) and hT.shape == (B, n_hidden)
    assert jnp.allclose(seq_out, ref_seq, atol=1e-4, rtol=1e-4)
    assert jnp.allclose(hT, ref_hT, atol=1e-4, rtol=1e-4)

    print("KERNEL_OK")
</pallas_src>

<mosaic_0001>
module attributes {stable_mosaic.version = 11 : i64} {
  func.func @_rnn_cell_kernel(%arg0: memref<2x16xf32, #tpu.memory_space<vmem>>, %arg1: memref<2x32xf32, #tpu.memory_space<vmem>>, %arg2: memref<16x40xf32, #tpu.memory_space<vmem>>, %arg3: memref<32x40xf32, #tpu.memory_space<vmem>>, %arg4: memref<1x40xf32, #tpu.memory_space<vmem>>, %arg5: memref<2x40xf32, #tpu.memory_space<vmem>>) attributes {dimension_semantics = [], scalar_prefetch = 0 : i64, scratch_operands = 0 : i64, tpu.core_type = #tpu.core_type<tc>} {
    %c0 = arith.constant 0 : index
    %c0_0 = arith.constant 0 : index
    %0 = vector.load %arg0[%c0, %c0_0] : memref<2x16xf32, #tpu.memory_space<vmem>>, vector<2x16xf32>
    %c0_1 = arith.constant 0 : index
    %c0_2 = arith.constant 0 : index
    %1 = vector.load %arg2[%c0_1, %c0_2] : memref<16x40xf32, #tpu.memory_space<vmem>>, vector<16x40xf32>
    %cst = arith.constant dense<0.000000e+00> : vector<2x40xf32>
    %2 = tpu.matmul %0, %1, %cst {dimension_numbers = #tpu.dot_dimension_numbers<[1], [0], [0], [1], [0, 0, 1, 1], [], []>} : vector<2x16xf32>, vector<16x40xf32>, vector<2x40xf32> -> vector<2x40xf32>
    %c0_3 = arith.constant 0 : index
    %c0_4 = arith.constant 0 : index
    %3 = vector.load %arg1[%c0_3, %c0_4] : memref<2x32xf32, #tpu.memory_space<vmem>>, vector<2x32xf32>
    %c0_5 = arith.constant 0 : index
    %c0_6 = arith.constant 0 : index
    %4 = vector.load %arg3[%c0_5, %c0_6] : memref<32x40xf32, #tpu.memory_space<vmem>>, vector<32x40xf32>
    %cst_7 = arith.constant dense<0.000000e+00> : vector<2x40xf32>
    %5 = tpu.matmul %3, %4, %cst_7 {dimension_numbers = #tpu.dot_dimension_numbers<[1], [0], [0], [1], [0, 0, 1, 1], [], []>} : vector<2x32xf32>, vector<32x40xf32>, vector<2x40xf32> -> vector<2x40xf32>
    %6 = arith.addf %2, %5 : vector<2x40xf32>
    %c0_8 = arith.constant 0 : index
    %c0_9 = arith.constant 0 : index
    %7 = vector.load %arg4[%c0_8, %c0_9] : memref<1x40xf32, #tpu.memory_space<vmem>>, vector<1x40xf32>
    %8 = vector.broadcast %7 : vector<1x40xf32> to vector<2x40xf32>
    %9 = arith.addf %6, %8 : vector<2x40xf32>
    %c0_10 = arith.constant 0 : index
    %c0_11 = arith.constant 0 : index
    %10 = vector.load %arg5[%c0_10, %c0_11] : memref<2x40xf32, #tpu.memory_space<vmem>>, vector<2x40xf32>
    tpu.vector_store %arg5[%c0_10, %c0_11], %9 {strides = array<i32>} : memref<2x40xf32, #tpu.memory_space<vmem>>, vector<2x40xf32>,
    return
  }
}

</mosaic_0001>

<llo_original>
// kernel: tpu_custom_call.1
$region0: #{tpu_custom_call.1}
  #allocation0 [shape = 'u32[]', space=smem, size = 0x4, offset = 0x4, fixed_abs, tag = 'smem constant byte address 0x4 - core index']
  #allocation1 [shape = 'u32[144,128]{1,0:T(1,128)}', space=vmem, size = 0x12000, scoped, tag = 'internal scratch']
  %s0 = inlined_call_operand.hbm [shape: f32[2,16], index: 0, kind: input, shape index: {}]
  %s1 = inlined_call_operand.vmem [shape: f32[2,32], index: 1, kind: input, shape index: {}]
  %s2 = inlined_call_operand.hbm [shape: f32[16,40], index: 2, kind: input, shape index: {}]
  %s3 = inlined_call_operand.hbm [shape: f32[32,40], index: 3, kind: input, shape index: {}]
  %s4 = inlined_call_operand.vmem [shape: f32[1,40], index: 4, kind: input, shape index: {}]
  %s5 = inlined_call_operand.hbm [shape: f32[2,40], index: 5, kind: output, shape index: {}]
  %s6 = sld [smem:[#allocation0]]
  $region42: #{tpu_custom_call.1} parent=0
    _
  %s8 = ssub.s32 1, %s6
  %s9 = scalar_select 0, %s8, %s6
  $region1: #{tpu_custom_call.1} parent=0
    #allocation2 [shape = 'u8[1024]{0}', space=vmem, size = 0x400, scoped, tag = 'input window, operand 0, single buffered']
    #allocation3 [shape = 's32[1]{0}', space=sflag, size = 0x4, scoped, tag = 'scoped memory for tpu_custom_call.1']
    #allocation4 [shape = 's32[1]{0}', space=sflag, size = 0x4, scoped, tag = 'scoped memory for tpu_custom_call.1']
    #allocation5 [shape = 'u8[8192]{0}', space=vmem, size = 0x2000, scoped, tag = 'input window, operand 2, single buffered']
    #allocation6 [shape = 's32[1]{0}', space=sflag, size = 0x4, scoped, tag = 'scoped memory for tpu_custom_call.1']
    #allocation7 [shape = 'u8[16384]{0}', space=vmem, size = 0x4000, scoped, tag = 'input window, operand 3, single buffered']
    #allocation8 [shape = 'u8[1024]{0}', space=vmem, size = 0x400, scoped, tag = 'output window, operand 0, single buffered']
    %10 = vsyncpa [#allocation3], 0
    %11 = vsyncpa [#allocation6], 0
    %12 = vsyncpa [#allocation4], 0
    // Predicated region
    $region2: #{tpu_custom_call.1} parent=1 // pred_check
      _
    $region3: #{tpu_custom_call.1} parent=1 // pred_check_branch
      %14 = sbr.rel (0) target = $region5
    $region4: #{tpu_custom_call.1} parent=1 // pred_region
      %s16 = ssub.s32 32, 32
      %17 = vsyncadd [#allocation3], %s16
      %s19 = sshll.u32 [#allocation2], 4
      %s20 = int_to_ptr.vmem [resolvable:$true] %s19
      %22 = dma.hbm_to_vmem [thread:$0]  %s0, 32, %s20, [#allocation3]
    $region5: #{tpu_custom_call.1} parent=1 // pred_fallthru
      _
    // Predicated region
    $region6: #{tpu_custom_call.1} parent=1 // pred_check
      _
    $region7: #{tpu_custom_call.1} parent=1 // pred_check_branch
      %24 = sbr.rel (0) target = $region9
    $region8: #{tpu_custom_call.1} parent=1 // pred_region
      _
    $region9: #{tpu_custom_call.1} parent=1 // pred_fallthru
      _
    // Predicated region
    $region10: #{tpu_custom_call.1} parent=1 // pred_check
      _
    $region11: #{tpu_custom_call.1} parent=1 // pred_check_branch
      %26 = sbr.rel (0) target = $region13
    $region12: #{tpu_custom_call.1} parent=1 // pred_region
      %s28 = ssub.s32 256, 256
      %29 = vsyncadd [#allocation6], %s28
      %s30 = sshll.u32 [#allocation5], 4
      %s31 = int_to_ptr.vmem [resolvable:$true] %s30
      %36 = dma.hbm_to_vmem [thread:$0]  %s2, 256, %s31, [#allocation6], 128, 128, 8
    $region13: #{tpu_custom_call.1} parent=1 // pred_fallthru
      _
    // Predicated region
    $region14: #{tpu_custom_call.1} parent=1 // pred_check
      _
    $region15: #{tpu_custom_call.1} parent=1 // pred_check_branch
      %38 = sbr.rel (0) target = $region17
    $region16: #{tpu_custom_call.1} parent=1 // pred_region
      %s40 = ssub.s32 512, 512
      %41 = vsyncadd [#allocation6], %s40
      %s42 = sshll.u32 [#allocation7], 4
      %s43 = int_to_ptr.vmem [resolvable:$true] %s42
      %48 = dma.hbm_to_vmem [thread:$0]  %s3, 512, %s43, [#allocation6], 128, 128, 8
    $region17: #{tpu_custom_call.1} parent=1 // pred_fallthru
      _
    // Predicated region
    $region18: #{tpu_custom_call.1} parent=1 // pred_check
      _
    $region19: #{tpu_custom_call.1} parent=1 // pred_check_branch
      %50 = sbr.rel (0) target = $region21
    $region20: #{tpu_custom_call.1} parent=1 // pred_region
      _
    $region21: #{tpu_custom_call.1} parent=1 // pred_fallthru
      _
    // Predicated region
    $region22: #{tpu_custom_call.1} parent=1 // pred_check
      _
    $region23: #{tpu_custom_call.1} parent=1 // pred_check_branch
      %52 = sbr.rel (0) target = $region25
    $region24: #{tpu_custom_call.1} parent=1 // pred_region
      %53 = dma.done [#allocation3], 32
    $region25: #{tpu_custom_call.1} parent=1 // pred_fallthru
      _
    // Predicated region
    $region26: #{tpu_custom_call.1} parent=1 // pred_check
      _
    $region27: #{tpu_custom_call.1} parent=1 // pred_check_branch
      %55 = sbr.rel (0) target = $region29
    $region28: #{tpu_custom_call.1} parent=1 // pred_region
      %56 = dma.done [#allocation6], 256
    $region29: #{tpu_custom_call.1} parent=1 // pred_fallthru
      _
    // Predicated region
    $region30: #{tpu_custom_call.1} parent=1 // pred_check
      _
    $region31: #{tpu_custom_call.1} parent=1 // pred_check_branch
      %58 = sbr.rel (0) target = $region33
    $region32: #{tpu_custom_call.1} parent=1 // pred_region
      %59 = dma.done [#allocation6], 512
    $region33: #{tpu_custom_call.1} parent=1 // pred_fallthru
      _
    %v60 = vld [vmem:[#allocation2] sm:$0x3]
    %v61 = vld [vmem:[#allocation5] sm:$0xff]
    %v62 = vld [vmem:[#allocation5 + $0x8] sm:$0xff]
    %v63 = vld [vmem:[%s1] sm:$0x3]
    %v64 = vld [vmem:[#allocation7] sm:$0xff]
    %v65 = vld [vmem:[#allocation7 + $0x8] sm:$0xff]
    %v66 = vld [vmem:[#allocation7 + $0x10] sm:$0xff]
    %v67 = vld [vmem:[#allocation7 + $0x18] sm:$0xff]
    %vm68 = vcmask 261120
    %v70 = vsel %vm68, %v63, 0
    %72 = vmatprep.subr.mxu0 0.0
    %73 = vmatpush1.msra.mxu0 %v64
    %74 = vmatprep.subr.mxu0 0.0
    %75 = vmatpush1.msra.mxu0 %v65
    %76 = vmatprep.subr.mxu0 0.0
    %77 = vmatpush1.msra.mxu0 %v66
    %78 = vmatprep.subr.mxu0 0.0
    %79 = vmatpush1.msra.mxu0 %v67
    %80 = vmatprep.subr.mxu0 0.0
    %81 = vmatpush1.msra.mxu0 0.0
    %82 = vmatprep.subr.mxu0 0.0
    %83 = vmatpush1.msra.mxu0 0.0
    %84 = vmatprep.subr.mxu0 0.0
    %85 = vmatpush1.msra.mxu0 0.0
    %86 = vmatprep.subr.mxu0 0.0
    %87 = vmatpush1.msra.mxu0 0.0
    %88 = vmatprep.subr.mxu0 0.0
    %89 = vmatpush1.msra.mxu0 0.0
    %90 = vmatprep.subr.mxu0 0.0
    %91 = vmatpush1.msra.mxu0 0.0
    %92 = vmatprep.subr.mxu0 0.0
    %93 = vmatpush1.msra.mxu0 0.0
    %94 = vmatprep.subr.mxu0 0.0
    %95 = vmatpush1.msra.mxu0 0.0
    %96 = vmatprep.subr.mxu0 0.0
    %97 = vmatpush1.msra.mxu0 0.0
    %98 = vmatprep.subr.mxu0 0.0
    %99 = vmatpush1.msra.mxu0 0.0
    %100 = vmatprep.subr.mxu0 0.0
    %101 = vmatpush1.msra.mxu0 0.0
    %102 = vmatprep.subr.mxu0 0.0
    %103 = vmatpush1.msra.mxu0 0.0
    %104 = vmatprep.subr.mxu0 0.0
    %105 = vmatpush1.msra.mxu0 0.0
    %106 = vmatprep.subr.mxu0 0.0
    %107 = vmatpush1.msra.mxu0 0.0
    %108 = vmatprep.subr.mxu0 0.0
    %109 = vmatpush1.msra.mxu0 0.0
    %110 = vmatprep.subr.mxu0 0.0
    %111 = vmatpush1.msra.mxu0 0.0
    %112 = vmatprep.subr.mxu0 0.0
    %113 = vmatpush1.msra.mxu0 0.0
    %114 = vmatprep.subr.mxu0 0.0
    %115 = vmatpush1.msra.mxu0 0.0
    %116 = vmatprep.subr.mxu0 0.0
    %117 = vmatpush1.msra.mxu0 0.0
    %118 = vmatprep.subr.mxu0 0.0
    %119 = vmatpush1.msra.mxu0 0.0
    %120 = vmatprep.subr.mxu0 0.0
    %121 = vmatpush1.msra.mxu0 0.0
    %122 = vmatprep.subr.mxu0 0.0
    %123 = vmatpush1.msra.mxu0 0.0
    %124 = vmatprep.subr.mxu0 0.0
    %125 = vmatpush1.msra.mxu0 0.0
    %126 = vmatprep.subr.mxu0 0.0
    %127 = vmatpush1.msra.mxu0 0.0
    %128 = vmatprep.subr.mxu0 0.0
    %129 = vmatpush1.msra.mxu0 0.0
    %130 = vmatprep.subr.mxu0 0.0
    %131 = vmatpush1.msra.mxu0 0.0
    %132 = vmatprep.subr.mxu0 0.0
    %133 = vmatpush1.msra.mxu0 0.0
    %134 = vmatprep.subr.mxu0 0.0
    %135 = vmatpush1.msra.mxu0 0.0
    %136 = vmatprep.mubr.f32.mxu0 0.0
    %137 = vmatmul.mubr.f32.gmra.mrb[0].mxu0 %v70
    %v138 = vpop.f32.mrb[0].mxu0
    %v139 = vadd.f32 0.0, %v138
    %v140 = vpop.f32.mrb[0].mxu0
    %141 = vdwg.mxu0
    %vm142 = vcmask 130048
    %v144 = vsel %vm142, %v60, 0
    %146 = vmatprep.subr.mxu0 0.0
    %147 = vmatpush1.msra.mxu0 %v61
    %148 = vmatprep.subr.mxu0 0.0
    %149 = vmatpush1.msra.mxu0 %v62
    %150 = vmatprep.subr.mxu0 0.0
    %151 = vmatpush1.msra.mxu0 0.0
    %152 = vmatprep.subr.mxu0 0.0
    %153 = vmatpush1.msra.mxu0 0.0
    %154 = vmatprep.subr.mxu0 0.0
    %155 = vmatpush1.msra.mxu0 0.0
    %156 = vmatprep.subr.mxu0 0.0
    %157 = vmatpush1.msra.mxu0 0.0
    %158 = vmatprep.subr.mxu0 0.0
    %159 = vmatpush1.msra.mxu0 0.0
    %160 = vmatprep.subr.mxu0 0.0
    %161 = vmatpush1.msra.mxu0 0.0
    %162 = vmatprep.subr.mxu0 0.0
    %163 = vmatpush1.msra.mxu0 0.0
    %164 = vmatprep.subr.mxu0 0.0
    %165 = vmatpush1.msra.mxu0 0.0
    %166 = vmatprep.subr.mxu0 0.0
    %167 = vmatpush1.msra.mxu0 0.0
    %168 = vmatprep.subr.mxu0 0.0
    %169 = vmatpush1.msra.mxu0 0.0
    %170 = vmatprep.subr.mxu0 0.0
    %171 = vmatpush1.msra.mxu0 0.0
    %172 = vmatprep.subr.mxu0 0.0
    %173 = vmatpush1.msra.mxu0 0.0
    %174 = vmatprep.subr.mxu0 0.0
    %175 = vmatpush1.msra.mxu0 0.0
    %176 = vmatprep.subr.mxu0 0.0
    %177 = vmatpush1.msra.mxu0 0.0
    %178 = vmatprep.subr.mxu0 0.0
    %179 = vmatpush1.msra.mxu0 0.0
    %180 = vmatprep.subr.mxu0 0.0
    %181 = vmatpush1.msra.mxu0 0.0
    %182 = vmatprep.subr.mxu0 0.0
    %183 = vmatpush1.msra.mxu0 0.0
    %184 = vmatprep.subr.mxu0 0.0
    %185 = vmatpush1.msra.mxu0 0.0
    %186 = vmatprep.subr.mxu0 0.0
    %187 = vmatpush1.msra.mxu0 0.0
    %188 = vmatprep.subr.mxu0 0.0
    %189 = vmatpush1.msra.mxu0 0.0
    %190 = vmatprep.subr.mxu0 0.0
    %191 = vmatpush1.msra.mxu0 0.0
    %192 = vmatprep.subr.mxu0 0.0
    %193 = vmatpush1.msra.mxu0 0.0
    %194 = vmatprep.subr.mxu0 0.0
    %195 = vmatpush1.msra.mxu0 0.0
    %196 = vmatprep.subr.mxu0 0.0
    %197 = vmatpush1.msra.mxu0 0.0
    %198 = vmatprep.subr.mxu0 0.0
    %199 = vmatpush1.msra.mxu0 0.0
    %200 = vmatprep.subr.mxu0 0.0
    %201 = vmatpush1.msra.mxu0 0.0
    %202 = vmatprep.subr.mxu0 0.0
    %203 = vmatpush1.msra.mxu0 0.0
    %204 = vmatprep.subr.mxu0 0.0
    %205 = vmatpush1.msra.mxu0 0.0
    %206 = vmatprep.subr.mxu0 0.0
    %207 = vmatpush1.msra.mxu0 0.0
    %208 = vmatprep.subr.mxu0 0.0
    %209 = vmatpush1.msra.mxu0 0.0
    %210 = vmatprep.mubr.f32.mxu0 0.0
    %211 = vmatmul.mubr.f32.gmra.mrb[0].mxu0 %v144
    %v212 = vpop.f32.mrb[0].mxu0
    %v213 = vadd.f32 %v139, %v212
    %v214 = vpop.f32.mrb[0].mxu0
    %215 = vdwg.mxu0
    %v216 = vld [vmem:[%s4] sm:$0x1]
    %v218 = vlaneseq
    %v219 = vshrl.u32 %v218, 7
    %v220 = vsub.s32 0, %v219
    %v221 = vrot.slane %v216, %v220
    %v223 = vadd.f32 %v213, %v221
    %vm224 = vcmask 320512
    %225 = vst.msk [vmem:[#allocation8] sm:$0x3] %vm224, %v223
    // Predicated region
    $region34: #{tpu_custom_call.1} parent=1 // pred_check
      _
    $region35: #{tpu_custom_call.1} parent=1 // pred_check_branch
      %227 = sbr.rel (0) target = $region37
    $region36: #{tpu_custom_call.1} parent=1 // pred_region
      %s229 = ssub.s32 32, 32
      %230 = vsyncadd [#allocation4], %s229
      %s232 = sshll.u32 [#allocation8], 4
      %s233 = int_to_ptr.vmem [resolvable:$true] %s232
      %235 = dma.vmem_to_hbm [thread:$0]  %s233, 32, %s5, [#allocation4]
    $region37: #{tpu_custom_call.1} parent=1 // pred_fallthru
      _
    // Predicated region
    $region38: #{tpu_custom_call.1} parent=1 // pred_check
      _
    $region39: #{tpu_custom_call.1} parent=1 // pred_check_branch
      %237 = sbr.rel (0) target = $region41
    $region40: #{tpu_custom_call.1} parent=1 // pred_region
      %238 = dma.done [#allocation4], 32
    $region41: #{tpu_custom_call.1} parent=1 // pred_fallthru
      _
    %239 = vsyncpa [#allocation3], 1
    %240 = vsyncpa [#allocation6], 1
    %241 = vsyncpa [#allocation4], 1

</llo_original>
